<compile_context>
chip_gen: v7x
topology: tpu7x:2x2x1
jax: 0.10.0
libtpu: 0.0.40
codegen_flags: <defaults>
</compile_context>

<pallas_src>
import functools

import jax
import jax.numpy as jnp
from jax import lax
from jax.experimental import pallas as pl
from jax.experimental.pallas import tpu as pltpu

EPS = 1e-5  # nn.InstanceNorm2d default


@functools.lru_cache(maxsize=None)
def _roll_shift_sign() -> int:
    """Probe pltpu.roll's rotation convention once.

    The kernel needs jnp.roll semantics (result[p] = v[p - shift]).  A tiny probe
    kernel verifies the hardware rotate convention so a sign flip can never silently
    mirror the conv taps; returns +1 if pltpu.roll already matches jnp.roll, else -1.
    """
    def probe(x_ref, o_ref):
        o_ref[...] = pltpu.roll(x_ref[...], 1, axis=1)

    x = lax.broadcasted_iota(jnp.int32, (8, 128), 1)
    out = pl.pallas_call(
        probe, out_shape=jax.ShapeDtypeStruct((8, 128), jnp.int32)
    )(x)
    return 1 if int(out[0, 1]) == 0 else -1


def _make_kernel(n_blocks, P, H, W, k_pad, roll_sign):
    HW = H * W
    inv_hw = 1.0 / HW
    n_taps = 9 * P

    def lroll(v, shift):
        # Lane rotation with jnp.roll semantics: result[p] = v[p - shift].
        return pltpu.roll(v, (roll_sign * shift) % HW, axis=1)

    def kernel(x_ref, w_ref, o_ref, tap_ref):
        x = x_ref[...]                                    # (P, HW) f32, P = G*C

        # Boundary masks for in-kernel reflection padding (computed once,
        # reused by all 16 convs).
        lane = lax.broadcasted_iota(jnp.int32, (P, HW), 1)
        col = lane % W
        row = lane // W
        col_first, col_last = col == 0, col == W - 1
        row_first, row_last = row == 0, row == H - 1

        # Zero the padded tail of the tap stack once per grid step so the
        # (zero) weight columns never multiply stale VMEM contents.
        if k_pad > n_taps:
            tap_ref[n_taps:, :] = jnp.zeros((k_pad - n_taps, HW), jnp.float32)

        def conv3x3(a, conv_idx):
            # Row-shifted variants with reflection at top/bottom.  Each unique
            # roll is computed ONCE (XLU slot) and reused by both where() arms;
            # the masked positions are exactly where the flat-lane rotation
            # wraps, so wrapped values are never used.
            r_wp = lroll(a, W)                         # a[row-1, col]
            r_wn = lroll(a, -W)                        # a[row+1, col]
            dn = jnp.where(row_first, r_wn, r_wp)      # kh = 0 (reflect at top)
            up = jnp.where(row_last, r_wp, r_wn)       # kh = 2 (reflect at bottom)

            for g, r in enumerate((dn, a, up)):        # kh = 0, 1, 2
                r_p = lroll(r, 1)                      # r[row, col-1]
                r_n = lroll(r, -1)                     # r[row, col+1]
                left = jnp.where(col_first, r_n, r_p)  # kw = 0 (reflect at left)
                right = jnp.where(col_last, r_p, r_n)  # kw = 2 (reflect at right)
                tap_ref[(3 * g + 0) * P:(3 * g + 1) * P, :] = left
                tap_ref[(3 * g + 1) * P:(3 * g + 2) * P, :] = r
                tap_ref[(3 * g + 2) * P:(3 * g + 3) * P, :] = right

            # One small MXU matmul per conv: (P, k_pad) @ (k_pad, HW) -> (P, HW).
            # The weight matrix is block-diagonal across the packed samples, so
            # this is exactly the per-sample 3x3 conv (bias omitted: it is
            # cancelled by the following no-affine InstanceNorm).
            return jnp.dot(w_ref[conv_idx], tap_ref[...],
                           preferred_element_type=jnp.float32,
                           precision=lax.Precision.HIGHEST)

        def inorm(y):
            # One-pass statistics (mean, E[y^2]); lane reductions on the XLU,
            # rsqrt on the EUP.  Clamp variance against fp-negative rounding.
            mean = jnp.sum(y, axis=1, keepdims=True) * inv_hw
            var = jnp.sum(y * y, axis=1, keepdims=True) * inv_hw - mean * mean
            var = jnp.maximum(var, 0.0)
            return (y - mean) * lax.rsqrt(var + EPS)

        # All residual blocks fused; the activation never leaves VMEM/vregs.
        for blk in range(n_blocks):
            h = jnp.maximum(inorm(conv3x3(x, 2 * blk)), 0.0)
            x = x + inorm(conv3x3(h, 2 * blk + 1))

        o_ref[...] = x

    return kernel


def _pack_weights(w_pt, G, k_pad):
    """PyTorch layout (nb, 2, C_out, C_in, 3, 3) -> lane-dense block-diagonal
    (nb*2, P, k_pad) with P = G*C, column index = (kh*3+kw)*P + g*C + c_in."""
    nb, two, C = w_pt.shape[0], w_pt.shape[1], w_pt.shape[2]
    P = G * C
    # -> (nb, 2, 9, C_out, C_in), tap index k = kh*3 + kw
    w9 = jnp.transpose(w_pt, (0, 1, 4, 5, 2, 3)).reshape(nb, two, 9, C, C)
    # Block-diagonal over the G packed samples: (nb, 2, 9, P_out, P_in)
    eye = jnp.eye(G, dtype=w_pt.dtype)
    wbd = jnp.einsum("gh,nvkoc->nvkgohc", eye, w9).reshape(nb, two, 9, P, P)
    # -> (nb*2, P_out, 9*P_in), then zero-pad the contraction dim to k_pad
    wmat = jnp.transpose(wbd, (0, 1, 3, 2, 4)).reshape(nb * two, P, 9 * P)
    return jnp.pad(wmat, ((0, 0), (0, 0), (0, k_pad - 9 * P)))


@functools.partial(jax.jit, static_argnums=(2, 3, 4))
def _forward(x_packed, w_mat, H, W, roll_sign):
    n_steps, P, HW = x_packed.shape
    n_convs, _, k_pad = w_mat.shape
    kernel = _make_kernel(n_convs // 2, P, H, W, k_pad, roll_sign)
    return pl.pallas_call(
        kernel,
        out_shape=jax.ShapeDtypeStruct((n_steps, P, HW), jnp.float32),
        grid=(n_steps,),
        in_specs=[
            pl.BlockSpec((None, P, HW), lambda n: (n, 0, 0)),
            pl.BlockSpec(w_mat.shape, lambda n: (0, 0, 0)),
        ],
        out_specs=pl.BlockSpec((None, P, HW), lambda n: (n, 0, 0)),
        scratch_shapes=[pltpu.VMEM((k_pad, HW), jnp.float32)],
        compiler_params=pltpu.CompilerParams(
            dimension_semantics=("parallel",)),   # engages both TCs when n_steps > 1
    )(x_packed, w_mat)


def resnet_block_forward(x_nchw, weights_pt, biases=None):
    """x_nchw: (N, C, H, W).  weights_pt: (n_blocks, 2, C_out, C_in, 3, 3) in
    PyTorch OIHW layout.  `biases` is accepted for API compatibility but ignored:
    a conv bias immediately followed by a no-affine InstanceNorm is mathematically
    a no-op (the mean absorbs it; variance is unchanged)."""
    del biases
    N, C, H, W = x_nchw.shape
    # Pack G samples per grid step to fill the 8 sublanes (and collapse the grid).
    G = max(1, 8 // C)
    while N % G != 0:
        G -= 1
    P = G * C
    k_pad = ((9 * P + 127) // 128) * 128            # tile-aligned contraction dim
    w_mat = _pack_weights(jnp.asarray(weights_pt, jnp.float32), G, k_pad)
    x = jnp.asarray(x_nchw, jnp.float32).reshape(N // G, P, H * W)  # pure reshape
    out = _forward(x, w_mat, H, W, _roll_shift_sign())
    return out.reshape(N, C, H, W)


def _make_params(key, dim, n_blocks):
    # Deterministic synthetic init.  Conv weights ~ kaiming-normal-like
    # (std = sqrt(2 / fan_in), fan_in = dim*3*3); biases ~ PyTorch's default conv
    # bias init range.  (In the reference module res_blocks is a plain Python list,
    # so init_weights never visits these convs; any deterministic init is fine.)
    std = (2.0 / (dim * 9)) ** 0.5
    bound = 1.0 / (dim * 9) ** 0.5
    wkey, bkey = jax.random.split(key)
    weights = jax.random.normal(wkey, (n_blocks, 2, dim, dim, 3, 3), jnp.float32) * std
    biases = jax.random.uniform(bkey, (n_blocks, 2, dim), jnp.float32,
                                minval=-bound, maxval=bound)
    return weights, biases


@jax.jit
def _reference_forward(x_nchw, weights, biases):
    """Pure-JAX reference of the PyTorch module (bias INCLUDED here, which also
    verifies that dropping it in the kernel is indeed a mathematical no-op)."""
    x = x_nchw.astype(jnp.float32)
    _, C, _, _ = x.shape
    n_blocks = weights.shape[0]

    def conv(a, w, b):
        ap = jnp.pad(a, ((0, 0), (0, 0), (1, 1), (1, 1)), mode="reflect")
        y = lax.conv_general_dilated(ap, w, (1, 1), "VALID",
                                     dimension_numbers=("NCHW", "OIHW", "NCHW"),
                                     precision=lax.Precision.HIGHEST)
        return y + b.reshape(1, C, 1, 1)

    def inorm(y):
        mean = jnp.mean(y, axis=(2, 3), keepdims=True)
        var = jnp.mean((y - mean) ** 2, axis=(2, 3), keepdims=True)
        return (y - mean) * lax.rsqrt(var + EPS)

    for blk in range(n_blocks):
        h = jnp.maximum(inorm(conv(x, weights[blk, 0], biases[blk, 0])), 0.0)
        x = x + inorm(conv(h, weights[blk, 1], biases[blk, 1]))
    return x


if __name__ == "__main__":
    N, C, H, W = 2, 4, 16, 16
    n_blocks = 8

    key = jax.random.PRNGKey(0)
    key, kx = jax.random.split(key)
    x = jax.random.normal(kx, (N, C, H, W), jnp.float32)
    weights, biases = _make_params(key, C, n_blocks)

    out = resnet_block_forward(x, weights, biases)
    jax.block_until_ready(out)
    assert out.shape == (N, C, H, W)
    assert bool(jnp.all(jnp.isfinite(out)))

    ref = _reference_forward(x, weights, biases)
    max_err = float(jnp.max(jnp.abs(out - ref)))
    assert jnp.allclose(out, ref, rtol=1e-3, atol=1e-3), f"max abs err {max_err}"

    print("KERNEL_OK")
</pallas_src>

<mosaic_0001>
module attributes {stable_mosaic.version = 11 : i64} {
  func.func @probe(%arg0: memref<8x128xi32, #tpu.memory_space<vmem>>, %arg1: memref<8x128xi32, #tpu.memory_space<vmem>>) attributes {dimension_semantics = [], scalar_prefetch = 0 : i64, scratch_operands = 0 : i64, tpu.core_type = #tpu.core_type<tc>} {
    %c0 = arith.constant 0 : index
    %c0_0 = arith.constant 0 : index
    %0 = vector.load %arg0[%c0, %c0_0] : memref<8x128xi32, #tpu.memory_space<vmem>>, vector<8x128xi32>
    %c1_i32 = arith.constant 1 : i32
    %1 = tpu.dynamic_rotate %0 by %c1_i32 dim 1 : vector<8x128xi32>, i32 -> vector<8x128xi32>
    %c0_1 = arith.constant 0 : index
    %c0_2 = arith.constant 0 : index
    %2 = vector.load %arg1[%c0_1, %c0_2] : memref<8x128xi32, #tpu.memory_space<vmem>>, vector<8x128xi32>
    tpu.vector_store %arg1[%c0_1, %c0_2], %1 {strides = array<i32>} : memref<8x128xi32, #tpu.memory_space<vmem>>, vector<8x128xi32>,
    return
  }
}

</mosaic_0001>

<llo_original>
// kernel: tpu_custom_call.1
$region0: #{tpu_custom_call.1}
  #allocation0 [shape = 'u32[]', space=smem, size = 0x4, offset = 0x4, fixed_abs, tag = 'smem constant byte address 0x4 - core index']
  #allocation1 [shape = 'u32[144,128]{1,0:T(1,128)}', space=vmem, size = 0x12000, scoped, tag = 'internal scratch']
  %s0 = inlined_call_operand.hbm [shape: s32[8,128], index: 0, kind: input, shape index: {}]
  %s1 = inlined_call_operand.hbm [shape: s32[8,128], index: 1, kind: output, shape index: {}]
  %s2 = sld [smem:[#allocation0]]
  $region18: #{tpu_custom_call.1} parent=0
    _
  %s4 = ssub.s32 1, %s2
  %s5 = scalar_select 0, %s4, %s2
  $region1: #{tpu_custom_call.1} parent=0
    #allocation2 [shape = 'u8[4096]{0}', space=vmem, size = 0x1000, scoped, tag = 'input window, operand 0, single buffered']
    #allocation3 [shape = 's32[1]{0}', space=sflag, size = 0x4, scoped, tag = 'scoped memory for tpu_custom_call.1']
    #allocation4 [shape = 's32[1]{0}', space=sflag, size = 0x4, scoped, tag = 'scoped memory for tpu_custom_call.1']
    #allocation5 [shape = 'u8[4096]{0}', space=vmem, size = 0x1000, scoped, tag = 'output window, operand 0, single buffered']
    %6 = vsyncpa [#allocation3], 0
    %7 = vsyncpa [#allocation4], 0
    // Predicated region
    $region2: #{tpu_custom_call.1} parent=1 // pred_check
      _
    $region3: #{tpu_custom_call.1} parent=1 // pred_check_branch
      %9 = sbr.rel (0) target = $region5
    $region4: #{tpu_custom_call.1} parent=1 // pred_region
      %s11 = ssub.s32 128, 128
      %12 = vsyncadd [#allocation3], %s11
      %s14 = sshll.u32 [#allocation2], 4
      %s15 = int_to_ptr.vmem [resolvable:$true] %s14
      %17 = dma.hbm_to_vmem [thread:$0]  %s0, 128, %s15, [#allocation3]
    $region5: #{tpu_custom_call.1} parent=1 // pred_fallthru
      _
    // Predicated region
    $region6: #{tpu_custom_call.1} parent=1 // pred_check
      _
    $region7: #{tpu_custom_call.1} parent=1 // pred_check_branch
      %19 = sbr.rel (0) target = $region9
    $region8: #{tpu_custom_call.1} parent=1 // pred_region
      %20 = dma.done [#allocation3], 128
    $region9: #{tpu_custom_call.1} parent=1 // pred_fallthru
      _
    %v21 = vld [vmem:[#allocation2] sm:$0xff]
    %22 = vrot.lane.b32.xlu0 %v21, 1
    %v23 = vpop.permute.xlu0 %22
    %24 = vst [vmem:[#allocation5] sm:$0xff] %v23
    // Predicated region
    $region10: #{tpu_custom_call.1} parent=1 // pred_check
      _
    $region11: #{tpu_custom_call.1} parent=1 // pred_check_branch
      %26 = sbr.rel (0) target = $region13
    $region12: #{tpu_custom_call.1} parent=1 // pred_region
      %s28 = ssub.s32 128, 128
      %29 = vsyncadd [#allocation4], %s28
      %s31 = sshll.u32 [#allocation5], 4
      %s32 = int_to_ptr.vmem [resolvable:$true] %s31
      %34 = dma.vmem_to_hbm [thread:$0]  %s32, 128, %s1, [#allocation4]
    $region13: #{tpu_custom_call.1} parent=1 // pred_fallthru
      _
    // Predicated region
    $region14: #{tpu_custom_call.1} parent=1 // pred_check
      _
    $region15: #{tpu_custom_call.1} parent=1 // pred_check_branch
      %36 = sbr.rel (0) target = $region17
    $region16: #{tpu_custom_call.1} parent=1 // pred_region
      %37 = dma.done [#allocation4], 128
    $region17: #{tpu_custom_call.1} parent=1 // pred_fallthru
      _
    %38 = vsyncpa [#allocation3], 1
    %39 = vsyncpa [#allocation4], 1

</llo_original>
